<compile_context>
chip_gen: v6e
topology: v6e:2x2x1
jax: 0.10.0
libtpu: 0.0.40
codegen_flags: <defaults>
</compile_context>

<pallas_src>
import functools
import math

import jax
import jax.numpy as jnp
from jax.experimental import pallas as pl
from jax.experimental.pallas import tpu as pltpu


def num_harmonics(n, m):
    """Number of spherical harmonics of degree m on S^{n-1} (sphere in R^n)."""
    if m == 0:
        return 1
    return int((2 * m + n - 2) * math.comb(m + n - 3, m - 1) // m)


def gegenbauer(z, degree, alpha):
    """Gegenbauer polynomial C_degree^alpha(z) via the three-term recurrence.

    Coefficients are folded at trace time (Python floats) so each step is two multiplies
    and a subtract on the VPU — no vector divide.
    """
    c_prev = jnp.ones_like(z)
    if degree == 0:
        return c_prev
    c_curr = (2.0 * float(alpha)) * z
    for k in range(2, degree + 1):
        a_k = 2.0 * (k + alpha - 1.0) / k
        b_k = (k + 2.0 * alpha - 2.0) / k
        c_next = a_k * z * c_curr - b_k * c_prev
        c_prev, c_curr = c_curr, c_next
    return c_curr


def _spherical_kernel(xT_ref, v_ref, linv_ref, o_ref, *, degree, alpha):
    # Transposed layout: batch on the lane (last) axis.
    #   xT_ref:   (n, tm)   tile of points (coords x batch)
    #   v_ref:    (M, n)    fundamental system
    #   linv_ref: (M, M)    L^{-1}
    #   o_ref:    (M, tm)   harmonics x batch (lane-dense store)
    z = jnp.dot(v_ref[...], xT_ref[...], preferred_element_type=jnp.float32)    # (M, tm)
    geg = gegenbauer(z, degree, alpha)                                           # full-lane VPU
    out = jnp.dot(linv_ref[...], geg, preferred_element_type=jnp.float32)        # (M, tm)
    o_ref[...] = out.astype(o_ref.dtype)


def _round_up(v, m):
    return ((v + m - 1) // m) * m


def normalized_spherical_functions(x, V, L_inv, *, degree, alpha, tm=512,
                                   out_dtype=jnp.float32):
    """Pallas forward: x (N, n) -> (N, num_harmonics)."""
    if degree > 0 and float(alpha) == 0.0:
        # TODO(synk): alpha == 0 (circle S^1) needs the Chebyshev limit of the recurrence.
        raise NotImplementedError("Gegenbauer recurrence degenerates for alpha == 0.")

    N, n = x.shape
    M = V.shape[0]

    # Lane tile: multiple of 128, at most the (padded) batch, at least 128.
    tm = max(128, _round_up(min(int(tm), _round_up(N, 128)), 128))
    grid = pl.cdiv(N, tm)
    n_pad = grid * tm

    xT = jnp.asarray(x, jnp.float32).T                       # (n, N)  batch on lanes
    if n_pad != N:
        xT = jnp.pad(xT, ((0, 0), (0, n_pad - N)))           # zero-pad; sliced off below
    Vf = jnp.asarray(V, jnp.float32)                         # (M, n)
    Linv = jnp.asarray(L_inv, jnp.float32)                   # (M, M)

    kernel = functools.partial(_spherical_kernel, degree=degree, alpha=float(alpha))
    outT = pl.pallas_call(
        kernel,
        out_shape=jax.ShapeDtypeStruct((M, n_pad), out_dtype),
        grid_spec=pltpu.PrefetchScalarGridSpec(
            num_scalar_prefetch=0,
            grid=(grid,),
            in_specs=[
                pl.BlockSpec((n, tm), lambda i: (0, i)),      # points tile (batch on lanes)
                pl.BlockSpec((M, n), lambda i: (0, 0)),       # fundamental system (resident)
                pl.BlockSpec((M, M), lambda i: (0, 0)),       # whitening L^{-1} (resident)
            ],
            out_specs=pl.BlockSpec((M, tm), lambda i: (0, i)),
        ),
        compiler_params=pltpu.CompilerParams(
            dimension_semantics=("parallel",)),
    )(xT, Vf, Linv)

    # Single wrapper-side transpose back to the module's (N, M) layout.
    return outT[:, :N].T


def reference_forward(x, V, L_inv, degree, alpha):
    z = x @ V.T
    return gegenbauer(z, degree, alpha) @ L_inv.T


if __name__ == "__main__":
    # ----- deterministic "module __init__" setup -------------------------------------------
    dimension = 2          # sphere S^2 embedded in R^3
    degree = 4
    n = dimension + 1
    M = num_harmonics(n, degree)          # 9 harmonics of degree 4 on S^2
    alpha = (n - 2) / 2.0

    key = jax.random.PRNGKey(0)
    k_v, k_x = jax.random.split(key)

    # fundamental_system: M points on the sphere (synthetic, deterministic)
    V = jax.random.normal(k_v, (M, n), dtype=jnp.float32)
    V = V / jnp.linalg.norm(V, axis=-1, keepdims=True)

    # Gram matrix of zonal Gegenbauer kernel on the fundamental system, Cholesky whitening.
    gram = gegenbauer(V @ V.T, degree, alpha)
    gram = gram + 1e-6 * jnp.eye(M, dtype=jnp.float32)   # numerical jitter
    L = jnp.linalg.cholesky(gram)
    L_inv = jax.scipy.linalg.solve_triangular(L, jnp.eye(M, dtype=jnp.float32), lower=True)

    # `const` is computed (as in the reference __init__) but unused in forward.
    const = math.sqrt(2.0 / (dimension + 1)) * math.exp(
        (math.log(math.pi) * (dimension + 1) / 2.0 - math.lgamma((dimension + 1) / 2.0)) / 2.0)
    # TODO(synk): exact zonal-normalization constant of the library's Gegenbauer class only
    # rescales the output (it cancels through the Cholesky whitening up to sqrt(c)).

    # ----- forward --------------------------------------------------------------------------
    N = 1000   # intentionally NOT a multiple of the tile: exercises cdiv + padding path
    x = jax.random.normal(k_x, (N, n), dtype=jnp.float32)
    x = x / jnp.linalg.norm(x, axis=-1, keepdims=True)    # points on the sphere

    out = normalized_spherical_functions(x, V, L_inv, degree=degree, alpha=alpha, tm=512)
    out = jax.block_until_ready(out)

    ref = reference_forward(x, V, L_inv, degree, alpha)
    assert out.shape == (N, M)
    assert jnp.allclose(out, ref, atol=1e-3, rtol=1e-3), "kernel mismatch vs reference"

    print("KERNEL_OK")
</pallas_src>

<mosaic_0001>
module attributes {stable_mosaic.version = 11 : i64} {
  func.func @_spherical_kernel(%arg0: i32, %arg1: memref<3x512xf32, #tpu.memory_space<vmem>>, %arg2: memref<9x3xf32, #tpu.memory_space<vmem>>, %arg3: memref<9x9xf32, #tpu.memory_space<vmem>>, %arg4: memref<9x512xf32, #tpu.memory_space<vmem>>) attributes {dimension_semantics = [#tpu.dimension_semantics<parallel>], iteration_bounds = array<i64: 2>, scalar_prefetch = 0 : i64, scratch_operands = 0 : i64, tpu.core_type = #tpu.core_type<tc>, window_params = [{transform_indices = @transform_0, window_bounds = array<i64: 3, 512>}, {pipeline_mode = #tpu.pipeline_mode<synchronous>, transform_indices = @transform_1, window_bounds = array<i64: 9, 3>}, {pipeline_mode = #tpu.pipeline_mode<synchronous>, transform_indices = @transform_2, window_bounds = array<i64: 9, 9>}, {transform_indices = @transform_3, window_bounds = array<i64: 9, 512>}]} {
    %c0 = arith.constant 0 : index
    %c0_0 = arith.constant 0 : index
    %0 = vector.load %arg2[%c0, %c0_0] : memref<9x3xf32, #tpu.memory_space<vmem>>, vector<9x3xf32>
    %c0_1 = arith.constant 0 : index
    %c0_2 = arith.constant 0 : index
    %1 = vector.load %arg1[%c0_1, %c0_2] : memref<3x512xf32, #tpu.memory_space<vmem>>, vector<3x512xf32>
    %cst = arith.constant dense<0.000000e+00> : vector<9x512xf32>
    %2 = tpu.matmul %0, %1, %cst {dimension_numbers = #tpu.dot_dimension_numbers<[1], [0], [0], [1], [0, 0, 1, 1], [], []>} : vector<9x3xf32>, vector<3x512xf32>, vector<9x512xf32> -> vector<9x512xf32>
    %cst_3 = arith.constant 1.000000e+00 : f32
    %3 = vector.broadcast %cst_3 : f32 to vector<9x512xf32>
    %cst_4 = arith.constant 1.000000e+00 : f32
    %4 = vector.broadcast %cst_4 : f32 to vector<9x512xf32>
    %5 = arith.mulf %4, %2 : vector<9x512xf32>
    %cst_5 = arith.constant 1.500000e+00 : f32
    %6 = vector.broadcast %cst_5 : f32 to vector<9x512xf32>
    %7 = arith.mulf %6, %2 : vector<9x512xf32>
    %8 = arith.mulf %7, %5 : vector<9x512xf32>
    %cst_6 = arith.constant 5.000000e-01 : f32
    %9 = vector.broadcast %cst_6 : f32 to vector<9x512xf32>
    %10 = arith.mulf %9, %3 : vector<9x512xf32>
    %11 = arith.subf %8, %10 : vector<9x512xf32>
    %cst_7 = arith.constant 1.66666663 : f32
    %12 = vector.broadcast %cst_7 : f32 to vector<9x512xf32>
    %13 = arith.mulf %12, %2 : vector<9x512xf32>
    %14 = arith.mulf %13, %11 : vector<9x512xf32>
    %cst_8 = arith.constant 0.666666686 : f32
    %15 = vector.broadcast %cst_8 : f32 to vector<9x512xf32>
    %16 = arith.mulf %15, %5 : vector<9x512xf32>
    %17 = arith.subf %14, %16 : vector<9x512xf32>
    %cst_9 = arith.constant 1.750000e+00 : f32
    %18 = vector.broadcast %cst_9 : f32 to vector<9x512xf32>
    %19 = arith.mulf %18, %2 : vector<9x512xf32>
    %20 = arith.mulf %19, %17 : vector<9x512xf32>
    %cst_10 = arith.constant 7.500000e-01 : f32
    %21 = vector.broadcast %cst_10 : f32 to vector<9x512xf32>
    %22 = arith.mulf %21, %11 : vector<9x512xf32>
    %23 = arith.subf %20, %22 : vector<9x512xf32>
    %c0_11 = arith.constant 0 : index
    %c0_12 = arith.constant 0 : index
    %24 = vector.load %arg3[%c0_11, %c0_12] : memref<9x9xf32, #tpu.memory_space<vmem>>, vector<9x9xf32>
    %cst_13 = arith.constant dense<0.000000e+00> : vector<9x512xf32>
    %25 = tpu.matmul %24, %23, %cst_13 {dimension_numbers = #tpu.dot_dimension_numbers<[1], [0], [0], [1], [0, 0, 1, 1], [], []>} : vector<9x9xf32>, vector<9x512xf32>, vector<9x512xf32> -> vector<9x512xf32>
    %c0_14 = arith.constant 0 : index
    %c0_15 = arith.constant 0 : index
    %26 = vector.load %arg4[%c0_14, %c0_15] : memref<9x512xf32, #tpu.memory_space<vmem>>, vector<9x512xf32>
    tpu.vector_store %arg4[%c0_14, %c0_15], %25 {strides = array<i32>} : memref<9x512xf32, #tpu.memory_space<vmem>>, vector<9x512xf32>,
    return
  }
  func.func @transform_0(%arg0: i32) -> (i32, i32) {
    %c0_i32 = arith.constant 0 : i32
    %c0_i32_0 = arith.constant 0 : i32
    return %c0_i32, %arg0 : i32, i32
  }
  func.func @transform_1(%arg0: i32) -> (i32, i32) {
    %c0_i32 = arith.constant 0 : i32
    %c0_i32_0 = arith.constant 0 : i32
    %c0_i32_1 = arith.constant 0 : i32
    return %c0_i32, %c0_i32_0 : i32, i32
  }
  func.func @transform_2(%arg0: i32) -> (i32, i32) {
    %c0_i32 = arith.constant 0 : i32
    %c0_i32_0 = arith.constant 0 : i32
    %c0_i32_1 = arith.constant 0 : i32
    return %c0_i32, %c0_i32_0 : i32, i32
  }
  func.func @transform_3(%arg0: i32) -> (i32, i32) {
    %c0_i32 = arith.constant 0 : i32
    %c0_i32_0 = arith.constant 0 : i32
    return %c0_i32, %arg0 : i32, i32
  }
}

</mosaic_0001>

<llo_original>
// kernel: tpu_custom_call.1
$region0: #{tpu_custom_call.1}
  #allocation0 [shape = 'u32[]', space=smem, size = 0x4, offset = 0x4, fixed_abs, tag = 'smem constant byte address 0x4 - core index']
  #allocation1 [shape = 'u32[144,128]{1,0:T(1,128)}', space=vmem, size = 0x12000, scoped, tag = 'internal scratch']
  %s0 = inlined_call_operand.hbm [shape: f32[3,1024], index: 0, kind: input, shape index: {}]
  %s1 = inlined_call_operand.vmem [shape: f32[9,3], index: 1, kind: input, shape index: {}]
  %s2 = inlined_call_operand.vmem [shape: f32[9,9], index: 2, kind: input, shape index: {}]
  %s3 = inlined_call_operand.hbm [shape: f32[9,1024], index: 3, kind: output, shape index: {}]
  %s4 = sld [smem:[#allocation0]]
  $region49: #{tpu_custom_call.1} parent=0
    _
  %s6 = ssub.s32 1, %s4
  %s7 = scalar_select 0, %s6, %s4
  $region1: #{tpu_custom_call.1} parent=0
    #allocation2 [shape = 'u8[16384]{0}', space=vmem, size = 0x4000, scoped, tag = 'input window, operand 0']
    #allocation3 [shape = 's32[2]{0}', space=sflag, size = 0x8, scoped, tag = 'scoped memory for tpu_custom_call.1']
    #allocation4 [shape = 's32[2]{0}', space=sflag, size = 0x8, scoped, tag = 'scoped memory for tpu_custom_call.1']
    #allocation5 [shape = 'u8[65536]{0}', space=vmem, size = 0x10000, scoped, tag = 'output window, operand 0']
    %8 = vsyncpa [#allocation3], 0
    %s9 = scalar_lea.sflag [#allocation3], 1
    %10 = vsyncpa %s9, 0
    %11 = vsyncpa [#allocation4], 0
    %s12 = scalar_lea.sflag [#allocation4], 1
    %13 = vsyncpa %s12, 0
    loop: start=0, step=1, limit=4
    $region2: #{tpu_custom_call.1} parent=1 // loop_pre_header
      _
    $region3: #{tpu_custom_call.1} parent=1 // loop_header
      %s15 = sphi 0, %s19
      %p16 = scmp.ge.s32.totalorder %s15, 4
      %s25 = sphi 0, %s27
      %s28 = sphi 0, %s25
      %s29 = sphi 0, %s28
      %s45 = sphi 0, %s29
      %s49 = sphi 0, %s49
      %s51 = sphi 0, %s49
      %s52 = sphi 0, %s51
      %s66 = sphi 0, %s52
      %s70 = sphi 0, %s70
      %s72 = sphi 0, %s70
      %s73 = sphi 0, %s72
      %s87 = sphi 0, %s73
      %s93 = sphi 0, %s95
      %s96 = sphi 0, %s93
      %s97 = sphi 0, %s96
      %s113 = sphi 0, %s97
    $region4: #{tpu_custom_call.1} parent=1 // loop_header_branch
      %18 = sbr.rel (%p16) target = $region8
    $region5: #{tpu_custom_call.1} parent=1 // loop_body
      %s20 = ssub.s32 %s15, 1
      %s21 = ssub.s32 %s15, 2
      %s22 = sadd.s32 %s15, 1
      %s23 = ssub.s32 %s15, %s22
      %p24 = scmp.eq.s32.totalorder %s23, 0
      %s26 = sadd.s32 %s25, 1
      %s27 = scalar_select %p24, %s25, %s26
      %p30 = pneg %p24
      %p31 = scmp.eq.s32.totalorder %s15, 1
      %p32 = por %p30, %p31
      %p33 = scmp.ne.s32.totalorder %s25, %s28
      %p34 = scmp.eq.s32.totalorder %s15, 0
      %p35 = por %p33, %p34
      %p36 = scmp.ne.s32.totalorder %s25, %s28
      %p37 = scmp.eq.s32.totalorder %s20, 1
      %p38 = por %p36, %p37
      %p39 = scmp.ne.s32.totalorder %s28, %s29
      %p40 = scmp.eq.s32.totalorder %s20, 0
      %p41 = por %p39, %p40
      %p42 = scmp.ne.s32.totalorder %s28, %s29
      %p43 = scmp.eq.s32.totalorder %s21, 1
      %p44 = por %p42, %p43
      %p46 = scmp.ne.s32.totalorder %s29, %s45
      %p47 = scmp.eq.s32.totalorder %s21, 0
      %p48 = por %p46, %p47
      %s50 = sadd.s32 %s49, 1
      %p53 = scmp.eq.s32.totalorder %s15, 1
      %p54 = scmp.ne.s32.totalorder %s49, %s51
      %p55 = scmp.eq.s32.totalorder %s15, 0
      %p56 = por %p54, %p55
      %p57 = scmp.ne.s32.totalorder %s49, %s51
      %p58 = scmp.eq.s32.totalorder %s20, 1
      %p59 = por %p57, %p58
      %p60 = scmp.ne.s32.totalorder %s51, %s52
      %p61 = scmp.eq.s32.totalorder %s20, 0
      %p62 = por %p60, %p61
      %p63 = scmp.ne.s32.totalorder %s51, %s52
      %p64 = scmp.eq.s32.totalorder %s21, 1
      %p65 = por %p63, %p64
      %p67 = scmp.ne.s32.totalorder %s52, %s66
      %p68 = scmp.eq.s32.totalorder %s21, 0
      %p69 = por %p67, %p68
      %s71 = sadd.s32 %s70, 1
      %p74 = scmp.eq.s32.totalorder %s15, 1
      %p75 = scmp.ne.s32.totalorder %s70, %s72
      %p76 = scmp.eq.s32.totalorder %s15, 0
      %p77 = por %p75, %p76
      %p78 = scmp.ne.s32.totalorder %s70, %s72
      %p79 = scmp.eq.s32.totalorder %s20, 1
      %p80 = por %p78, %p79
      %p81 = scmp.ne.s32.totalorder %s72, %s73
      %p82 = scmp.eq.s32.totalorder %s20, 0
      %p83 = por %p81, %p82
      %p84 = scmp.ne.s32.totalorder %s72, %s73
      %p85 = scmp.eq.s32.totalorder %s21, 1
      %p86 = por %p84, %p85
      %p88 = scmp.ne.s32.totalorder %s73, %s87
      %p89 = scmp.eq.s32.totalorder %s21, 0
      %p90 = por %p88, %p89
      %s91 = ssub.s32 %s15, %s22
      %p92 = scmp.eq.s32.totalorder %s91, 0
      %s94 = sadd.s32 %s93, 1
      %s95 = scalar_select %p92, %s93, %s94
      %p98 = pneg %p92
      %p99 = scmp.eq.s32.totalorder %s15, 1
      %p100 = por %p98, %p99
      %p101 = scmp.ne.s32.totalorder %s93, %s96
      %p102 = scmp.eq.s32.totalorder %s15, 0
      %p103 = por %p101, %p102
      %p104 = scmp.ne.s32.totalorder %s93, %s96
      %p105 = scmp.eq.s32.totalorder %s20, 1
      %p106 = por %p104, %p105
      %p107 = scmp.ne.s32.totalorder %s96, %s97
      %p108 = scmp.eq.s32.totalorder %s20, 0
      %p109 = por %p107, %p108
      %p110 = scmp.ne.s32.totalorder %s96, %s97
      %p111 = scmp.eq.s32.totalorder %s21, 1
      %p112 = por %p110, %p111
      %p114 = scmp.ne.s32.totalorder %s97, %s113
      %p115 = scmp.eq.s32.totalorder %s21, 0
      %p116 = por %p114, %p115
      %p117 = scmp.le.s32.totalorder 1, %s15
      %p118 = scmp.lt.s32.totalorder %s15, 3
      %p119 = pnand %p117, %p118
      %p120 = pneg %p119
      // Predicated region
      $region9: #{tpu_custom_call.1} parent=5 // pred_check
        _
      $region10: #{tpu_custom_call.1} parent=5 // pred_check_branch
        %122 = sbr.rel (%p119) target = $region12
      $region11: #{tpu_custom_call.1} parent=5 // pred_region
        %s123 = ssub.s32 %s15, 1
        // Predicated region
        $region13: #{tpu_custom_call.1} parent=11 // pred_check
          %p124 = pneg %p62
        $region14: #{tpu_custom_call.1} parent=11 // pred_check_branch
          %126 = sbr.rel (%p124) target = $region16
        $region15: #{tpu_custom_call.1} parent=11 // pred_region
          _
        $region16: #{tpu_custom_call.1} parent=11 // pred_fallthru
          _
        // Predicated region
        $region17: #{tpu_custom_call.1} parent=11 // pred_check
          %p127 = pneg %p83
        $region18: #{tpu_custom_call.1} parent=11 // pred_check_branch
          %129 = sbr.rel (%p127) target = $region20
        $region19: #{tpu_custom_call.1} parent=11 // pred_region
          _
        $region20: #{tpu_custom_call.1} parent=11 // pred_fallthru
          _
      $region12: #{tpu_custom_call.1} parent=5 // pred_fallthru
        _
      %p130 = scmp.lt.s32.totalorder %s15, 2
      // Predicated region
      $region21: #{tpu_custom_call.1} parent=5 // pred_check
        %p131 = pneg %p130
      $region22: #{tpu_custom_call.1} parent=5 // pred_check_branch
        %133 = sbr.rel (%p131) target = $region24
      $region23: #{tpu_custom_call.1} parent=5 // pred_region
        // Predicated region
        $region25: #{tpu_custom_call.1} parent=23 // pred_check
          %p134 = pneg %p35
        $region26: #{tpu_custom_call.1} parent=23 // pred_check_branch
          %136 = sbr.rel (%p134) target = $region28
        $region27: #{tpu_custom_call.1} parent=23 // pred_region
          %s137 = sand.u32 %s25, 1
          %s138 = scalar_lea.sflag [#allocation3], %s137
          %s139 = sand.u32 %s25, 1
          %s140 = smul.addr %s139, 16
          %s141 = scalar_lea.vmem [#allocation2], %s140
          %s142 = smul.u32 4, %s15
          %s144 = ssub.s32 256, 256
          %145 = vsyncadd %s138, %s144
          %s146 = smul.addr %s142, 64
          %s147 = scalar_lea.hbm %s0, %s146
          %s149 = sshll.u32 %s141, 4
          %s150 = int_to_ptr.vmem [resolvable:$true] %s149
          %152 = dma.hbm_to_vmem [thread:$0]  %s147, 256, %s150, %s138
        $region28: #{tpu_custom_call.1} parent=23 // pred_fallthru
          _
      $region24: #{tpu_custom_call.1} parent=5 // pred_fallthru
        _
      %p153 = scmp.le.s32.totalorder 1, %s15
      %p154 = scmp.lt.s32.totalorder %s15, 3
      %p155 = pnand %p153, %p154
      %p156 = pneg %p155
      // Predicated region
      $region29: #{tpu_custom_call.1} parent=5 // pred_check
        _
      $region30: #{tpu_custom_call.1} parent=5 // pred_check_branch
        %158 = sbr.rel (%p155) target = $region32
      $region31: #{tpu_custom_call.1} parent=5 // pred_region
        %s159 = ssub.s32 %s15, 1
        %s160 = sand.u32 %s28, 1
        %s161 = scalar_lea.sflag [#allocation3], %s160
        %s162 = sand.u32 %s28, 1
        %s163 = smul.addr %s162, 16
        %s164 = scalar_lea.vmem [#allocation2], %s163
        // Predicated region
        $region33: #{tpu_custom_call.1} parent=31 // pred_check
          %p165 = pneg %p41
        $region34: #{tpu_custom_call.1} parent=31 // pred_check_branch
          %167 = sbr.rel (%p165) target = $region36
        $region35: #{tpu_custom_call.1} parent=31 // pred_region
          %168 = dma.done %s161, 256
        $region36: #{tpu_custom_call.1} parent=31 // pred_fallthru
          _
        %s169 = sand.u32 %s28, 1
        %s170 = scalar_lea.sflag [#allocation3], %s169
        %s171 = sand.u32 %s28, 1
        %s172 = smul.addr %s171, 16
        %s173 = scalar_lea.vmem [#allocation2], %s172
        %p174 = pneg %p41
        %p175 = pneg %p38
        %p176 = pneg %p62
        %p177 = pneg %p59
        %p178 = pneg %p83
        %p179 = pneg %p80
        %p180 = pneg %p109
        %p181 = pneg %p106
        %s182 = sand.u32 %s96, 1
        %s183 = scalar_lea.sflag [#allocation4], %s182
        %s184 = sand.u32 %s96, 1
        %s185 = smul.addr %s184, 64
        %s186 = scalar_lea.vmem [#allocation5], %s185
        %s187 = smul.u32 4, %s20
        %s188 = smul.u32 4, %s20
        %v189 = vld [vmem:[%s1] sm:$0xff]
        %v190 = vld [vmem:[%s1 + $0x8] sm:$0x1]
        %v191 = vld [vmem:[%s164] sm:$0x77]
        %v192 = vld [vmem:[%s164 + $0x8] sm:$0x77]
        %v195 = vcombine.high %v191, %v191
        %v196 = vcombine.high %v192, %v192
        %vm197 = vcmask 23552
        %v199 = vsel %vm197, %v189, 0
        %v202 = vsel %vm197, %v190, 0
        %vm204 = vcmask 1042432
        %v205 = vsel %vm204, %v191, 0
        %v207 = vsel %vm204, %v195, 0
        %v209 = vsel %vm204, %v192, 0
        %v211 = vsel %vm204, %v196, 0
        %213 = vmatprep.subr.mxu0 0.0
        %214 = vmatpush1.msra.mxu0 0.0
        %215 = vmatprep.subr.mxu0 0.0
        %216 = vmatpush1.msra.mxu0 0.0
        %217 = vmatprep.subr.mxu0 0.0
        %218 = vmatpush1.msra.mxu0 0.0
        %219 = vmatprep.subr.mxu0 0.0
        %220 = vmatpush1.msra.mxu0 0.0
        %221 = vmatprep.subr.mxu0 0.0
        %222 = vmatpush1.msra.mxu0 0.0
        %223 = vmatprep.subr.mxu0 0.0
        %224 = vmatpush1.msra.mxu0 0.0
        %225 = vmatprep.subr.mxu0 0.0
        %226 = vmatpush1.msra.mxu0 0.0
        %227 = vmatprep.subr.mxu0 0.0
        %228 = vmatpush1.msra.mxu0 0.0
        %229 = vmatprep.subr.mxu0 0.0
        %230 = vmatpush1.msra.mxu0 0.0
        %231 = vmatprep.subr.mxu0 0.0
        %232 = vmatpush1.msra.mxu0 0.0
        %233 = vmatprep.subr.mxu0 0.0
        %234 = vmatpush1.msra.mxu0 0.0
        %235 = vmatprep.subr.mxu0 0.0
        %236 = vmatpush1.msra.mxu0 0.0
        %237 = vmatprep.subr.mxu0 0.0
        %238 = vmatpush1.msra.mxu0 0.0
        %239 = vmatprep.subr.mxu0 0.0
        %240 = vmatpush1.msra.mxu0 0.0
        %241 = vmatprep.subr.mxu0 0.0
        %242 = vmatpush1.msra.mxu0 0.0
        %243 = vmatprep.subr.mxu0 %v207
        %244 = vmatpush1.msra.mxu0 %v205
        %245 = vmatprep.subr.mxu0 0.0
        %246 = vmatpush2.msra.mxu0 0.0
        %247 = vmatprep.subr.mxu0 0.0
        %248 = vmatpush2.msra.mxu0 0.0
        %249 = vmatprep.subr.mxu0 0.0
        %250 = vmatpush2.msra.mxu0 0.0
        %251 = vmatprep.subr.mxu0 0.0
        %252 = vmatpush2.msra.mxu0 0.0
        %253 = vmatprep.subr.mxu0 0.0
        %254 = vmatpush2.msra.mxu0 0.0
        %255 = vmatprep.subr.mxu0 0.0
        %256 = vmatpush2.msra.mxu0 0.0
        %257 = vmatprep.subr.mxu0 0.0
        %258 = vmatpush2.msra.mxu0 0.0
        %259 = vmatprep.subr.mxu0 0.0
        %260 = vmatpush2.msra.mxu0 0.0
        %261 = vmatprep.subr.mxu0 0.0
        %262 = vmatpush2.msra.mxu0 0.0
        %263 = vmatprep.subr.mxu0 0.0
        %264 = vmatpush2.msra.mxu0 0.0
        %265 = vmatprep.subr.mxu0 0.0
        %266 = vmatpush2.msra.mxu0 0.0
        %267 = vmatprep.subr.mxu0 0.0
        %268 = vmatpush2.msra.mxu0 0.0
        %269 = vmatprep.subr.mxu0 0.0
        %270 = vmatpush2.msra.mxu0 0.0
        %271 = vmatprep.subr.mxu0 0.0
        %272 = vmatpush2.msra.mxu0 0.0
        %273 = vmatprep.subr.mxu0 0.0
        %274 = vmatpush2.msra.mxu0 0.0
        %275 = vmatprep.subr.mxu0 0.0
        %276 = vmatpush2.msra.mxu0 0.0
        %277 = vmatprep.mubr.f32.mxu0 0.0
        %278 = vmatmul.mubr.f32.gmra.mxu0 %v199
        %v279 = vpop.f32.mrf.mxu0
        %v280 = vadd.f32 0.0, %v279
        %v281 = vpop.f32.mrf.mxu0
        %v282 = vadd.f32 0.0, %v281
        %283 = vmatprep.mubr.f32.mxu0 0.0
        %284 = vmatmul.mubr.f32.gmra.mxu0 %v202
        %v285 = vpop.f32.mrf.mxu0
        %v286 = vadd.f32 0.0, %v285
        %v287 = vpop.f32.mrf.mxu0
        %v288 = vadd.f32 0.0, %v287
        %289 = vdwg.mxu0
        %290 = vmatprep.subr.mxu0 0.0
        %291 = vmatpush1.msra.mxu0 0.0
        %292 = vmatprep.subr.mxu0 0.0
        %293 = vmatpush1.msra.mxu0 0.0
        %294 = vmatprep.subr.mxu0 0.0
        %295 = vmatpush1.msra.mxu0 0.0
        %296 = vmatprep.subr.mxu0 0.0
        %297 = vmatpush1.msra.mxu0 0.0
        %298 = vmatprep.subr.mxu0 0.0
        %299 = vmatpush1.msra.mxu0 0.0
        %300 = vmatprep.subr.mxu0 0.0
        %301 = vmatpush1.msra.mxu0 0.0
        %302 = vmatprep.subr.mxu0 0.0
        %303 = vmatpush1.msra.mxu0 0.0
        %304 = vmatprep.subr.mxu0 0.0
        %305 = vmatpush1.msra.mxu0 0.0
        %306 = vmatprep.subr.mxu0 0.0
        %307 = vmatpush1.msra.mxu0 0.0
        %308 = vmatprep.subr.mxu0 0.0
        %309 = vmatpush1.msra.mxu0 0.0
        %310 = vmatprep.subr.mxu0 0.0
        %311 = vmatpush1.msra.mxu0 0.0
        %312 = vmatprep.subr.mxu0 0.0
        %313 = vmatpush1.msra.mxu0 0.0
        %314 = vmatprep.subr.mxu0 0.0
        %315 = vmatpush1.msra.mxu0 0.0
        %316 = vmatprep.subr.mxu0 0.0
        %317 = vmatpush1.msra.mxu0 0.0
        %318 = vmatprep.subr.mxu0 0.0
        %319 = vmatpush1.msra.mxu0 0.0
        %320 = vmatprep.subr.mxu0 %v211
        %321 = vmatpush1.msra.mxu0 %v209
        %322 = vmatprep.subr.mxu0 0.0
        %323 = vmatpush2.msra.mxu0 0.0
        %324 = vmatprep.subr.mxu0 0.0
        %325 = vmatpush2.msra.mxu0 0.0
        %326 = vmatprep.subr.mxu0 0.0
        %327 = vmatpush2.msra.mxu0 0.0
        %328 = vmatprep.subr.mxu0 0.0
        %329 = vmatpush2.msra.mxu0 0.0
        %330 = vmatprep.subr.mxu0 0.0
        %331 = vmatpush2.msra.mxu0 0.0
        %332 = vmatprep.subr.mxu0 0.0
        %333 = vmatpush2.msra.mxu0 0.0
        %334 = vmatprep.subr.mxu0 0.0
        %335 = vmatpush2.msra.mxu0 0.0
        %336 = vmatprep.subr.mxu0 0.0
        %337 = vmatpush2.msra.mxu0 0.0
        %338 = vmatprep.subr.mxu0 0.0
        %339 = vmatpush2.msra.mxu0 0.0
        %340 = vmatprep.subr.mxu0 0.0
        %341 = vmatpush2.msra.mxu0 0.0
        %342 = vmatprep.subr.mxu0 0.0
        %343 = vmatpush2.msra.mxu0 0.0
        %344 = vmatprep.subr.mxu0 0.0
        %345 = vmatpush2.msra.mxu0 0.0
        %346 = vmatprep.subr.mxu0 0.0
        %347 = vmatpush2.msra.mxu0 0.0
        %348 = vmatprep.subr.mxu0 0.0
        %349 = vmatpush2.msra.mxu0 0.0
        %350 = vmatprep.subr.mxu0 0.0
        %351 = vmatpush2.msra.mxu0 0.0
        %352 = vmatprep.subr.mxu0 0.0
        %353 = vmatpush2.msra.mxu0 0.0
        %354 = vmatprep.mubr.f32.mxu0 0.0
        %355 = vmatmul.mubr.f32.gmra.mxu0 %v199
        %v356 = vpop.f32.mrf.mxu0
        %v357 = vadd.f32 0.0, %v356
        %v358 = vpop.f32.mrf.mxu0
        %v359 = vadd.f32 0.0, %v358
        %360 = vmatprep.mubr.f32.mxu0 0.0
        %361 = vmatmul.mubr.f32.gmra.mxu0 %v202
        %v362 = vpop.f32.mrf.mxu0
        %v363 = vadd.f32 0.0, %v362
        %v364 = vpop.f32.mrf.mxu0
        %v365 = vadd.f32 0.0, %v364
        %366 = vdwg.mxu0
        %v367 = vmul.f32 %v280, 1.5
        %v368 = vmul.f32 %v282, 1.5
        %v369 = vmul.f32 %v357, 1.5
        %v370 = vmul.f32 %v359, 1.5
        %v371 = vmul.f32 %v286, 1.5
        %v372 = vmul.f32 %v288, 1.5
        %v373 = vmul.f32 %v363, 1.5
        %v374 = vmul.f32 %v365, 1.5
        %v375 = vmul.f32 %v367, %v280
        %v376 = vmul.f32 %v368, %v282
        %v377 = vmul.f32 %v369, %v357
        %v378 = vmul.f32 %v370, %v359
        %v379 = vmul.f32 %v371, %v286
        %v380 = vmul.f32 %v372, %v288
        %v381 = vmul.f32 %v373, %v363
        %v382 = vmul.f32 %v374, %v365
        %v383 = vsub.f32 %v375, 0.5
        %v384 = vsub.f32 %v376, 0.5
        %v385 = vsub.f32 %v377, 0.5
        %v386 = vsub.f32 %v378, 0.5
        %v387 = vsub.f32 %v379, 0.5
        %v388 = vsub.f32 %v380, 0.5
        %v389 = vsub.f32 %v381, 0.5
        %v390 = vsub.f32 %v382, 0.5
        %v391 = vmul.f32 %v280, 1.6666666
        %v392 = vmul.f32 %v282, 1.6666666
        %v393 = vmul.f32 %v357, 1.6666666
        %v394 = vmul.f32 %v359, 1.6666666
        %v395 = vmul.f32 %v286, 1.6666666
        %v396 = vmul.f32 %v288, 1.6666666
        %v397 = vmul.f32 %v363, 1.6666666
        %v398 = vmul.f32 %v365, 1.6666666
        %v399 = vmul.f32 %v391, %v383
        %v400 = vmul.f32 %v392, %v384
        %v401 = vmul.f32 %v393, %v385
        %v402 = vmul.f32 %v394, %v386
        %v403 = vmul.f32 %v395, %v387
        %v404 = vmul.f32 %v396, %v388
        %v405 = vmul.f32 %v397, %v389
        %v406 = vmul.f32 %v398, %v390
        %v407 = vmul.f32 %v280, 0.6666667
        %v408 = vmul.f32 %v282, 0.6666667
        %v409 = vmul.f32 %v357, 0.6666667
        %v410 = vmul.f32 %v359, 0.6666667
        %v411 = vmul.f32 %v286, 0.6666667
        %v412 = vmul.f32 %v288, 0.6666667
        %v413 = vmul.f32 %v363, 0.6666667
        %v414 = vmul.f32 %v365, 0.6666667
        %v415 = vsub.f32 %v399, %v407
        %v416 = vsub.f32 %v400, %v408
        %v417 = vsub.f32 %v401, %v409
        %v418 = vsub.f32 %v402, %v410
        %v419 = vsub.f32 %v403, %v411
        %v420 = vsub.f32 %v404, %v412
        %v421 = vsub.f32 %v405, %v413
        %v422 = vsub.f32 %v406, %v414
        %v423 = vmul.f32 %v280, 1.75
        %v424 = vmul.f32 %v282, 1.75
        %v425 = vmul.f32 %v357, 1.75
        %v426 = vmul.f32 %v359, 1.75
        %v427 = vmul.f32 %v286, 1.75
        %v428 = vmul.f32 %v288, 1.75
        %v429 = vmul.f32 %v363, 1.75
        %v430 = vmul.f32 %v365, 1.75
        %v431 = vmul.f32 %v423, %v415
        %v432 = vmul.f32 %v424, %v416
        %v433 = vmul.f32 %v425, %v417
        %v434 = vmul.f32 %v426, %v418
        %v435 = vmul.f32 %v427, %v419
        %v436 = vmul.f32 %v428, %v420
        %v437 = vmul.f32 %v429, %v421
        %v438 = vmul.f32 %v430, %v422
        %v439 = vmul.f32 %v383, 0.75
        %v440 = vmul.f32 %v384, 0.75
        %v441 = vmul.f32 %v385, 0.75
        %v442 = vmul.f32 %v386, 0.75
        %v443 = vmul.f32 %v387, 0.75
        %v444 = vmul.f32 %v388, 0.75
        %v445 = vmul.f32 %v389, 0.75
        %v446 = vmul.f32 %v390, 0.75
        %v447 = vsub.f32 %v431, %v439
        %v448 = vsub.f32 %v432, %v440
        %v449 = vsub.f32 %v433, %v441
        %v450 = vsub.f32 %v434, %v442
        %v451 = vsub.f32 %v435, %v443
        %v452 = vsub.f32 %v436, %v444
        %v453 = vsub.f32 %v437, %v445
        %v454 = vsub.f32 %v438, %v446
        %v455 = vld [vmem:[%s2] sm:$0xff]
        %v456 = vld [vmem:[%s2 + $0x8] sm:$0x1]
        %vm457 = vcmask 72704
        %v459 = vsel %vm457, %v455, 0
        %v462 = vsel %vm457, %v456, 0
        %vm464 = vcmask 1040384
        %v466 = vsel %vm464, %v451, 0
        %v469 = vsel %vm464, %v452, 0
        %v472 = vsel %vm464, %v453, 0
        %v475 = vsel %vm464, %v454, 0
        %477 = vmatprep.subr.mxu0 0.0
        %478 = vmatpush1.msra.mxu0 0.0
        %479 = vmatprep.subr.mxu0 0.0
        %480 = vmatpush1.msra.mxu0 0.0
        %481 = vmatprep.subr.mxu0 0.0
        %482 = vmatpush1.msra.mxu0 0.0
        %483 = vmatprep.subr.mxu0 0.0
        %484 = vmatpush1.msra.mxu0 0.0
        %485 = vmatprep.subr.mxu0 0.0
        %486 = vmatpush1.msra.mxu0 0.0
        %487 = vmatprep.subr.mxu0 0.0
        %488 = vmatpush1.msra.mxu0 0.0
        %489 = vmatprep.subr.mxu0 0.0
        %490 = vmatpush1.msra.mxu0 0.0
        %491 = vmatprep.subr.mxu0 0.0
        %492 = vmatpush1.msra.mxu0 0.0
        %493 = vmatprep.subr.mxu0 0.0
        %494 = vmatpush1.msra.mxu0 0.0
        %495 = vmatprep.subr.mxu0 0.0
        %496 = vmatpush1.msra.mxu0 0.0
        %497 = vmatprep.subr.mxu0 0.0
        %498 = vmatpush1.msra.mxu0 0.0
        %499 = vmatprep.subr.mxu0 0.0
        %500 = vmatpush1.msra.mxu0 0.0
        %501 = vmatprep.subr.mxu0 0.0
        %502 = vmatpush1.msra.mxu0 0.0
        %503 = vmatprep.subr.mxu0 0.0
        %504 = vmatpush1.msra.mxu0 0.0
        %505 = vmatprep.subr.mxu0 %v469
        %506 = vmatpush1.msra.mxu0 %v466
        %507 = vmatprep.subr.mxu0 %v448
        %508 = vmatpush1.msra.mxu0 %v447
        %509 = vmatprep.subr.mxu0 0.0
        %510 = vmatpush2.msra.mxu0 0.0
        %511 = vmatprep.subr.mxu0 0.0
        %512 = vmatpush2.msra.mxu0 0.0
        %513 = vmatprep.subr.mxu0 0.0
        %514 = vmatpush2.msra.mxu0 0.0
        %515 = vmatprep.subr.mxu0 0.0
        %516 = vmatpush2.msra.mxu0 0.0
        %517 = vmatprep.subr.mxu0 0.0
        %518 = vmatpush2.msra.mxu0 0.0
        %519 = vmatprep.subr.mxu0 0.0
        %520 = vmatpush2.msra.mxu0 0.0
        %521 = vmatprep.subr.mxu0 0.0
        %522 = vmatpush2.msra.mxu0 0.0
        %523 = vmatprep.subr.mxu0 0.0
        %524 = vmatpush2.msra.mxu0 0.0
        %525 = vmatprep.subr.mxu0 0.0
        %526 = vmatpush2.msra.mxu0 0.0
        %527 = vmatprep.subr.mxu0 0.0
        %528 = vmatpush2.msra.mxu0 0.0
        %529 = vmatprep.subr.mxu0 0.0
        %530 = vmatpush2.msra.mxu0 0.0
        %531 = vmatprep.subr.mxu0 0.0
        %532 = vmatpush2.msra.mxu0 0.0
        %533 = vmatprep.subr.mxu0 0.0
        %534 = vmatpush2.msra.mxu0 0.0
        %535 = vmatprep.subr.mxu0 0.0
        %536 = vmatpush2.msra.mxu0 0.0
        %537 = vmatprep.subr.mxu0 0.0
        %538 = vmatpush2.msra.mxu0 0.0
        %539 = vmatprep.subr.mxu0 0.0
        %540 = vmatpush2.msra.mxu0 0.0
        %541 = vmatprep.mubr.f32.mxu0 0.0
        %542 = vmatmul.mubr.f32.gmra.mxu0 %v459
        %v543 = vpop.f32.mrf.mxu0
        %v544 = vadd.f32 0.0, %v543
        %v545 = vpop.f32.mrf.mxu0
        %v546 = vadd.f32 0.0, %v545
        %547 = vmatprep.mubr.f32.mxu0 0.0
        %548 = vmatmul.mubr.f32.gmra.mxu0 %v462
        %v549 = vpop.f32.mrf.mxu0
        %v550 = vadd.f32 0.0, %v549
        %v551 = vpop.f32.mrf.mxu0
        %v552 = vadd.f32 0.0, %v551
        %553 = vdwg.mxu0
        %554 = vmatprep.subr.mxu0 0.0
        %555 = vmatpush1.msra.mxu0 0.0
        %556 = vmatprep.subr.mxu0 0.0
        %557 = vmatpush1.msra.mxu0 0.0
        %558 = vmatprep.subr.mxu0 0.0
        %559 = vmatpush1.msra.mxu0 0.0
        %560 = vmatprep.subr.mxu0 0.0
        %561 = vmatpush1.msra.mxu0 0.0
        %562 = vmatprep.subr.mxu0 0.0
        %563 = vmatpush1.msra.mxu0 0.0
        %564 = vmatprep.subr.mxu0 0.0
        %565 = vmatpush1.msra.mxu0 0.0
        %566 = vmatprep.subr.mxu0 0.0
        %567 = vmatpush1.msra.mxu0 0.0
        %568 = vmatprep.subr.mxu0 0.0
        %569 = vmatpush1.msra.mxu0 0.0
        %570 = vmatprep.subr.mxu0 0.0
        %571 = vmatpush1.msra.mxu0 0.0
        %572 = vmatprep.subr.mxu0 0.0
        %573 = vmatpush1.msra.mxu0 0.0
        %574 = vmatprep.subr.mxu0 0.0
        %575 = vmatpush1.msra.mxu0 0.0
        %576 = vmatprep.subr.mxu0 0.0
        %577 = vmatpush1.msra.mxu0 0.0
        %578 = vmatprep.subr.mxu0 0.0
        %579 = vmatpush1.msra.mxu0 0.0
        %580 = vmatprep.subr.mxu0 0.0
        %581 = vmatpush1.msra.mxu0 0.0
        %582 = vmatprep.subr.mxu0 %v475
        %583 = vmatpush1.msra.mxu0 %v472
        %584 = vmatprep.subr.mxu0 %v450
        %585 = vmatpush1.msra.mxu0 %v449
        %586 = vmatprep.subr.mxu0 0.0
        %587 = vmatpush2.msra.mxu0 0.0
        %588 = vmatprep.subr.mxu0 0.0
        %589 = vmatpush2.msra.mxu0 0.0
        %590 = vmatprep.subr.mxu0 0.0
        %591 = vmatpush2.msra.mxu0 0.0
        %592 = vmatprep.subr.mxu0 0.0
        %593 = vmatpush2.msra.mxu0 0.0
        %594 = vmatprep.subr.mxu0 0.0
        %595 = vmatpush2.msra.mxu0 0.0
        %596 = vmatprep.subr.mxu0 0.0
        %597 = vmatpush2.msra.mxu0 0.0
        %598 = vmatprep.subr.mxu0 0.0
        %599 = vmatpush2.msra.mxu0 0.0
        %600 = vmatprep.subr.mxu0 0.0
        %601 = vmatpush2.msra.mxu0 0.0
        %602 = vmatprep.subr.mxu0 0.0
        %603 = vmatpush2.msra.mxu0 0.0
        %604 = vmatprep.subr.mxu0 0.0
        %605 = vmatpush2.msra.mxu0 0.0
        %606 = vmatprep.subr.mxu0 0.0
        %607 = vmatpush2.msra.mxu0 0.0
        %608 = vmatprep.subr.mxu0 0.0
        %609 = vmatpush2.msra.mxu0 0.0
        %610 = vmatprep.subr.mxu0 0.0
        %611 = vmatpush2.msra.mxu0 0.0
        %612 = vmatprep.subr.mxu0 0.0
        %613 = vmatpush2.msra.mxu0 0.0
        %614 = vmatprep.subr.mxu0 0.0
        %615 = vmatpush2.msra.mxu0 0.0
        %616 = vmatprep.subr.mxu0 0.0
        %617 = vmatpush2.msra.mxu0 0.0
        %618 = vmatprep.mubr.f32.mxu0 0.0
        %619 = vmatmul.mubr.f32.gmra.mxu0 %v459
        %v620 = vpop.f32.mrf.mxu0
        %v621 = vadd.f32 0.0, %v620
        %v622 = vpop.f32.mrf.mxu0
        %v623 = vadd.f32 0.0, %v622
        %624 = vmatprep.mubr.f32.mxu0 0.0
        %625 = vmatmul.mubr.f32.gmra.mxu0 %v462
        %v626 = vpop.f32.mrf.mxu0
        %v627 = vadd.f32 0.0, %v626
        %v628 = vpop.f32.mrf.mxu0
        %v629 = vadd.f32 0.0, %v628
        %630 = vdwg.mxu0
        %631 = vst [vmem:[%s186] sm:$0xff] %v544
        %632 = vst [vmem:[%s186 + $0x8] sm:$0xff] %v546
        %633 = vst [vmem:[%s186 + $0x10] sm:$0xff] %v621
        %634 = vst [vmem:[%s186 + $0x18] sm:$0xff] %v623
        %635 = vst [vmem:[%s186 + $0x20] sm:$0x1] %v550
        %636 = vst [vmem:[%s186 + $0x28] sm:$0x1] %v552
        %637 = vst [vmem:[%s186 + $0x30] sm:$0x1] %v627
        %638 = vst [vmem:[%s186 + $0x38] sm:$0x1] %v629
        %s639 = sand.u32 %s96, 1
        %s640 = scalar_lea.sflag [#allocation4], %s639
        %s641 = sand.u32 %s96, 1
        %s642 = smul.addr %s641, 64
        %s643 = scalar_lea.vmem [#allocation5], %s642
        // Predicated region
        $region37: #{tpu_custom_call.1} parent=31 // pred_check
          %p644 = pneg %p106
        $region38: #{tpu_custom_call.1} parent=31 // pred_check_branch
          %646 = sbr.rel (%p644) target = $region40
        $region39: #{tpu_custom_call.1} parent=31 // pred_region
          %s647 = smul.u32 4, %s20
          %s649 = ssub.s32 1024, 1024
          %650 = vsyncadd %s640, %s649
          %s651 = smul.addr %s647, 128
          %s652 = scalar_lea.hbm %s3, %s651
          %s653 = sshll.u32 %s643, 4
          %s654 = int_to_ptr.vmem [resolvable:$true] %s653
          %659 = dma.vmem_to_hbm [thread:$0]  %s654, 1024, %s652, %s640, 512, 1024, 32
        $region40: #{tpu_custom_call.1} parent=31 // pred_fallthru
          _
      $region32: #{tpu_custom_call.1} parent=5 // pred_fallthru
        _
      %p660 = scmp.le.s32.totalorder 2, %s15
      // Predicated region
      $region41: #{tpu_custom_call.1} parent=5 // pred_check
        %p661 = pneg %p660
      $region42: #{tpu_custom_call.1} parent=5 // pred_check_branch
        %663 = sbr.rel (%p661) target = $region44
      $region43: #{tpu_custom_call.1} parent=5 // pred_region
        %s664 = ssub.s32 %s15, 2
        // Predicated region
        $region45: #{tpu_custom_call.1} parent=43 // pred_check
          %p665 = pneg %p112
        $region46: #{tpu_custom_call.1} parent=43 // pred_check_branch
          %667 = sbr.rel (%p665) target = $region48
        $region47: #{tpu_custom_call.1} parent=43 // pred_region
          %s668 = sand.u32 %s97, 1
          %s669 = scalar_lea.sflag [#allocation4], %s668
          %s670 = sand.u32 %s97, 1
          %s671 = smul.addr %s670, 64
          %s672 = scalar_lea.vmem [#allocation5], %s671
          %673 = dma.done %s669, 1024
        $region48: #{tpu_custom_call.1} parent=43 // pred_fallthru
          _
      $region44: #{tpu_custom_call.1} parent=5 // pred_fallthru
        _
    $region6: #{tpu_custom_call.1} parent=1 // loop_footer
      %s19 = sadd.s32 1, %s15
    $region7: #{tpu_custom_call.1} parent=1 // loop_footer_branch
      %14 = sbr.rel target = $region3
    $region8: #{tpu_custom_call.1} parent=1 // loop_exit
      _
    %674 = vsyncpa [#allocation3], 1
    %s675 = scalar_lea.sflag [#allocation3], 1
    %676 = vsyncpa %s675, 1
    %677 = vsyncpa [#allocation4], 1
    %s678 = scalar_lea.sflag [#allocation4], 1
    %679 = vsyncpa %s678, 1

</llo_original>
